<compile_context>
chip_gen: v5e
topology: v5e:2x2
jax: 0.10.0
libtpu: 0.0.40
codegen_flags: <defaults>
</compile_context>

<pallas_src>
import functools

import jax
import jax.numpy as jnp
from jax.experimental import pallas as pl
from jax.experimental.pallas import tpu as pltpu

_LANE = 128


def _round_up(x, m):
    return ((x + m - 1) // m) * m


# ---------------------------------------------------------------------------
# Kernel
# ---------------------------------------------------------------------------
def _qnet_kernel(x_ref, w_ref, b_ref, o_ref, *, nS, H1, H2, nA, r2, r3):
    cdt = w_ref.dtype  # MXU compute dtype (bf16 by default)

    # Static slices of the packed, VMEM-resident parameter slabs.
    w1 = w_ref[0:nS, 0:H1]            # (nS, H1)  bf16
    w2 = w_ref[r2:r2 + H1, 0:H2]      # (H1, H2)  bf16
    w3 = w_ref[r3:r3 + H2, 0:nA]      # (H2, nA)  bf16
    b1 = b_ref[0:1, 0:H1]             # (1, H1)   f32
    b2 = b_ref[1:2, 0:H2]             # (1, H2)   f32
    b3 = b_ref[2:3, 0:nA]             # (1, nA)   f32

    x = x_ref[...]                    # (TILE_B, nS) bf16

    # fc1 + ReLU  (MXU in bf16, accumulate + VPU elementwise in f32)
    h1 = jnp.dot(x, w1, preferred_element_type=jnp.float32) + b1
    h1 = jnp.maximum(h1, 0.0).astype(cdt)
    # fc2 + ReLU
    h2 = jnp.dot(h1, w2, preferred_element_type=jnp.float32) + b2
    h2 = jnp.maximum(h2, 0.0).astype(cdt)
    # out (no activation)
    y = jnp.dot(h2, w3, preferred_element_type=jnp.float32) + b3
    o_ref[...] = y.astype(o_ref.dtype)


# ---------------------------------------------------------------------------
# Parameter handling
# ---------------------------------------------------------------------------
def init_params(key, nS, nA, hidden=(32, 64)):
    """Xavier-uniform weights (stored (in, out)), zero biases — matches
    QNet._initialize_weights()."""
    def xavier(k, fan_in, fan_out):
        limit = jnp.sqrt(6.0 / (fan_in + fan_out))
        return jax.random.uniform(
            k, (fan_in, fan_out), jnp.float32, minval=-limit, maxval=limit)

    k1, k2, k3 = jax.random.split(key, 3)
    return {
        "w1": xavier(k1, nS, hidden[0]),
        "b1": jnp.zeros((1, hidden[0]), jnp.float32),
        "w2": xavier(k2, hidden[0], hidden[1]),
        "b2": jnp.zeros((1, hidden[1]), jnp.float32),
        "w3": xavier(k3, hidden[1], nA),
        "b3": jnp.zeros((1, nA), jnp.float32),
    }


def pack_params(p, compute_dtype=jnp.bfloat16):
    """Pack w1/w2/w3 into one (rows, 128) compute-dtype slab (sections aligned
    to 16 sublanes) and b1/b2/b3 into one (8, 128) f32 slab."""
    nS, H1 = p["w1"].shape
    _, H2 = p["w2"].shape
    _, nA = p["w3"].shape

    r2 = _round_up(nS, 16)
    r3 = r2 + _round_up(H1, 16)
    rows = r3 + _round_up(H2, 16)

    w = jnp.zeros((rows, _LANE), compute_dtype)
    w = w.at[0:nS, 0:H1].set(p["w1"].astype(compute_dtype))
    w = w.at[r2:r2 + H1, 0:H2].set(p["w2"].astype(compute_dtype))
    w = w.at[r3:r3 + H2, 0:nA].set(p["w3"].astype(compute_dtype))

    b = jnp.zeros((8, _LANE), jnp.float32)
    b = b.at[0, 0:H1].set(p["b1"].reshape(-1).astype(jnp.float32))
    b = b.at[1, 0:H2].set(p["b2"].reshape(-1).astype(jnp.float32))
    b = b.at[2, 0:nA].set(p["b3"].reshape(-1).astype(jnp.float32))

    dims = dict(nS=nS, H1=H1, H2=H2, nA=nA, r2=r2, r3=r3)
    return w, b, dims


# ---------------------------------------------------------------------------
# Forward wrapper
# ---------------------------------------------------------------------------
def qnet_forward(x, w_packed, b_packed, dims, *, tile_b=512):
    """x: (B, nS) float32 -> (B, nA) float32."""
    B = x.shape[0]
    nS, H1, H2, nA = dims["nS"], dims["H1"], dims["H2"], dims["nA"]
    assert x.shape[1] == nS
    cdt = w_packed.dtype

    # Batch tile: large (pipelined / multiple of 8) but never bigger than the
    # (padded) batch itself.
    TB = min(tile_b, _round_up(B, 8))
    Bp = _round_up(B, TB)

    xb = x.astype(cdt)                       # bf16 halves the x HBM stream
    if Bp != B:
        xb = jnp.pad(xb, ((0, Bp - B), (0, 0)))  # zero tail; sliced off below

    flops = 2 * Bp * (nS * H1 + H1 * H2 + H2 * nA)
    bytes_accessed = (
        xb.size * xb.dtype.itemsize
        + Bp * nA * 4
        + w_packed.size * w_packed.dtype.itemsize
        + b_packed.size * 4
    )

    kernel = functools.partial(_qnet_kernel, **dims)

    out = pl.pallas_call(
        kernel,
        out_shape=jax.ShapeDtypeStruct((Bp, nA), jnp.float32),
        grid=(Bp // TB,),
        in_specs=[
            # x: streamed / double-buffered per batch tile
            pl.BlockSpec((TB, nS), lambda i: (i, 0)),
            # packed weights + biases: constant index map -> VMEM-resident
            pl.BlockSpec(w_packed.shape, lambda i: (0, 0)),
            pl.BlockSpec(b_packed.shape, lambda i: (0, 0)),
        ],
        out_specs=pl.BlockSpec((TB, nA), lambda i: (i, 0)),
        compiler_params=pltpu.CompilerParams(
            dimension_semantics=("parallel",)),
        cost_estimate=pl.CostEstimate(
            flops=flops, transcendentals=0, bytes_accessed=bytes_accessed),
    )(xb, w_packed, b_packed)

    return out[:B]


# ---------------------------------------------------------------------------
# Reference (mirrors the kernel's bf16-operand / f32-accumulate precision)
# ---------------------------------------------------------------------------
def qnet_reference(x, p, compute_dtype=jnp.bfloat16):
    bf = lambda a: a.astype(compute_dtype).astype(jnp.float32)
    h1 = jnp.maximum(jnp.dot(bf(x), bf(p["w1"])) + p["b1"], 0.0)
    h2 = jnp.maximum(jnp.dot(bf(h1), bf(p["w2"])) + p["b2"], 0.0)
    return jnp.dot(bf(h2), bf(p["w3"])) + p["b3"]


if __name__ == "__main__":
    nS, nA, B = 16, 8, 8
    key = jax.random.PRNGKey(0)
    k_x, k_p, k_x2 = jax.random.split(key, 3)

    params = init_params(k_p, nS, nA)
    w_packed, b_packed, dims = pack_params(params)

    # Small-batch check (single grid step).
    x = jax.random.normal(k_x, (B, nS), jnp.float32)
    out = jax.block_until_ready(qnet_forward(x, w_packed, b_packed, dims))
    ref = qnet_reference(x, params)
    assert out.shape == (B, nA)
    assert jnp.allclose(out, ref, atol=1e-4, rtol=1e-4), "mismatch vs reference (small B)"

    # Larger batch: exercises the batch grid, pipelining and the padded tail.
    B2 = 1000
    x2 = jax.random.normal(k_x2, (B2, nS), jnp.float32)
    out2 = jax.block_until_ready(
        qnet_forward(x2, w_packed, b_packed, dims, tile_b=512))
    ref2 = qnet_reference(x2, params)
    assert out2.shape == (B2, nA)
    assert jnp.allclose(out2, ref2, atol=1e-4, rtol=1e-4), "mismatch vs reference (large B)"

    print("KERNEL_OK")
</pallas_src>

<mosaic_0001>
module attributes {stable_mosaic.version = 11 : i64} {
  func.func @_qnet_kernel(%arg0: i32, %arg1: memref<8x16xbf16, #tpu.memory_space<vmem>>, %arg2: memref<112x128xbf16, #tpu.memory_space<vmem>>, %arg3: memref<8x128xf32, #tpu.memory_space<vmem>>, %arg4: memref<8x8xf32, #tpu.memory_space<vmem>>) attributes {dimension_semantics = [#tpu.dimension_semantics<parallel>], iteration_bounds = array<i64: 1>, scalar_prefetch = 0 : i64, scratch_operands = 0 : i64, tpu.core_type = #tpu.core_type<tc>, window_params = [{transform_indices = @transform_0, window_bounds = array<i64: 8, 16>}, {pipeline_mode = #tpu.pipeline_mode<synchronous>, transform_indices = @transform_1, window_bounds = array<i64: 112, 128>}, {pipeline_mode = #tpu.pipeline_mode<synchronous>, transform_indices = @transform_2, window_bounds = array<i64: 8, 128>}, {transform_indices = @transform_3, window_bounds = array<i64: 8, 8>}]} {
    %c0 = arith.constant 0 : index
    %c0_0 = arith.constant 0 : index
    %0 = vector.load %arg2[%c0, %c0_0] : memref<112x128xbf16, #tpu.memory_space<vmem>>, vector<16x32xbf16>
    %c16 = arith.constant 16 : index
    %c0_1 = arith.constant 0 : index
    %1 = vector.load %arg2[%c16, %c0_1] : memref<112x128xbf16, #tpu.memory_space<vmem>>, vector<32x64xbf16>
    %c48 = arith.constant 48 : index
    %c0_2 = arith.constant 0 : index
    %2 = vector.load %arg2[%c48, %c0_2] : memref<112x128xbf16, #tpu.memory_space<vmem>>, vector<64x8xbf16>
    %c0_3 = arith.constant 0 : index
    %c0_4 = arith.constant 0 : index
    %3 = vector.load %arg3[%c0_3, %c0_4] : memref<8x128xf32, #tpu.memory_space<vmem>>, vector<1x32xf32>
    %c1 = arith.constant 1 : index
    %c0_5 = arith.constant 0 : index
    %4 = vector.load %arg3[%c1, %c0_5] : memref<8x128xf32, #tpu.memory_space<vmem>>, vector<1x64xf32>
    %c2 = arith.constant 2 : index
    %c0_6 = arith.constant 0 : index
    %5 = vector.load %arg3[%c2, %c0_6] : memref<8x128xf32, #tpu.memory_space<vmem>>, vector<1x8xf32>
    %c0_7 = arith.constant 0 : index
    %c0_8 = arith.constant 0 : index
    %6 = vector.load %arg1[%c0_7, %c0_8] : memref<8x16xbf16, #tpu.memory_space<vmem>>, vector<8x16xbf16>
    %cst = arith.constant dense<0.000000e+00> : vector<8x32xf32>
    %7 = tpu.matmul %6, %0, %cst {dimension_numbers = #tpu.dot_dimension_numbers<[1], [0], [0], [1], [0, 0, 1, 1], [], []>} : vector<8x16xbf16>, vector<16x32xbf16>, vector<8x32xf32> -> vector<8x32xf32>
    %8 = vector.broadcast %3 : vector<1x32xf32> to vector<8x32xf32>
    %9 = arith.addf %7, %8 : vector<8x32xf32>
    %cst_9 = arith.constant 0.000000e+00 : f32
    %10 = vector.broadcast %cst_9 : f32 to vector<8x32xf32>
    %11 = arith.maximumf %9, %10 : vector<8x32xf32>
    %12 = arith.truncf %11 : vector<8x32xf32> to vector<8x32xbf16>
    %cst_10 = arith.constant dense<0.000000e+00> : vector<8x64xf32>
    %13 = tpu.matmul %12, %1, %cst_10 {dimension_numbers = #tpu.dot_dimension_numbers<[1], [0], [0], [1], [0, 0, 1, 1], [], []>} : vector<8x32xbf16>, vector<32x64xbf16>, vector<8x64xf32> -> vector<8x64xf32>
    %14 = vector.broadcast %4 : vector<1x64xf32> to vector<8x64xf32>
    %15 = arith.addf %13, %14 : vector<8x64xf32>
    %cst_11 = arith.constant 0.000000e+00 : f32
    %16 = vector.broadcast %cst_11 : f32 to vector<8x64xf32>
    %17 = arith.maximumf %15, %16 : vector<8x64xf32>
    %18 = arith.truncf %17 : vector<8x64xf32> to vector<8x64xbf16>
    %cst_12 = arith.constant dense<0.000000e+00> : vector<8x8xf32>
    %19 = tpu.matmul %18, %2, %cst_12 {dimension_numbers = #tpu.dot_dimension_numbers<[1], [0], [0], [1], [0, 0, 1, 1], [], []>} : vector<8x64xbf16>, vector<64x8xbf16>, vector<8x8xf32> -> vector<8x8xf32>
    %20 = vector.broadcast %5 : vector<1x8xf32> to vector<8x8xf32>
    %21 = arith.addf %19, %20 : vector<8x8xf32>
    %c0_13 = arith.constant 0 : index
    %c0_14 = arith.constant 0 : index
    %22 = vector.load %arg4[%c0_13, %c0_14] : memref<8x8xf32, #tpu.memory_space<vmem>>, vector<8x8xf32>
    tpu.vector_store %arg4[%c0_13, %c0_14], %21 {strides = array<i32>} : memref<8x8xf32, #tpu.memory_space<vmem>>, vector<8x8xf32>,
    return
  }
  func.func @transform_0(%arg0: i32) -> (i32, i32) {
    %c0_i32 = arith.constant 0 : i32
    %c0_i32_0 = arith.constant 0 : i32
    return %arg0, %c0_i32 : i32, i32
  }
  func.func @transform_1(%arg0: i32) -> (i32, i32) {
    %c0_i32 = arith.constant 0 : i32
    %c0_i32_0 = arith.constant 0 : i32
    %c0_i32_1 = arith.constant 0 : i32
    return %c0_i32, %c0_i32_0 : i32, i32
  }
  func.func @transform_2(%arg0: i32) -> (i32, i32) {
    %c0_i32 = arith.constant 0 : i32
    %c0_i32_0 = arith.constant 0 : i32
    %c0_i32_1 = arith.constant 0 : i32
    return %c0_i32, %c0_i32_0 : i32, i32
  }
  func.func @transform_3(%arg0: i32) -> (i32, i32) {
    %c0_i32 = arith.constant 0 : i32
    %c0_i32_0 = arith.constant 0 : i32
    return %arg0, %c0_i32 : i32, i32
  }
}

</mosaic_0001>

<llo_original>
// kernel: tpu_custom_call.1
$region0: #{tpu_custom_call.1}
  #allocation0 [shape = 'u32[]', space=smem, size = 0x4, offset = 0x4, fixed_abs, tag = 'smem constant byte address 0x4 - core index']
  #allocation1 [shape = 'u32[72,128]{1,0:T(1,128)}', space=vmem, size = 0x9000, scoped, tag = 'internal scratch']
  %s0 = inlined_call_operand.hbm [shape: bf16[8,16], index: 0, kind: input, shape index: {}]
  %s1 = inlined_call_operand.hbm [shape: bf16[112,128], index: 1, kind: input, shape index: {}]
  %s2 = inlined_call_operand.hbm [shape: f32[8,128], index: 2, kind: input, shape index: {}]
  %s3 = inlined_call_operand.hbm [shape: f32[8,8], index: 3, kind: output, shape index: {}]
  %s4 = sld [smem:[#allocation0]]
  $region34: #{tpu_custom_call.1} parent=0
    _
  %s6 = ssub.s32 1, %s4
  %s7 = scalar_select 0, %s6, %s4
  $region1: #{tpu_custom_call.1} parent=0
    #allocation2 [shape = 'u8[2048]{0}', space=vmem, size = 0x800, scoped, tag = 'input window, operand 0, single buffered']
    #allocation3 [shape = 's32[1]{0}', space=sflag, size = 0x4, scoped, tag = 'scoped memory for tpu_custom_call.1']
    #allocation4 [shape = 's32[1]{0}', space=sflag, size = 0x4, scoped, tag = 'scoped memory for tpu_custom_call.1']
    #allocation5 [shape = 'u8[28672]{0}', space=vmem, size = 0x7000, scoped, tag = 'input window, operand 1, single buffered']
    #allocation6 [shape = 's32[1]{0}', space=sflag, size = 0x4, scoped, tag = 'scoped memory for tpu_custom_call.1']
    #allocation7 [shape = 'u8[4096]{0}', space=vmem, size = 0x1000, scoped, tag = 'input window, operand 2, single buffered']
    #allocation8 [shape = 'u8[4096]{0}', space=vmem, size = 0x1000, scoped, tag = 'output window, operand 0, single buffered']
    %8 = vsyncpa [#allocation3], 0
    %9 = vsyncpa [#allocation6], 0
    %10 = vsyncpa [#allocation4], 0
    // Predicated region
    $region2: #{tpu_custom_call.1} parent=1 // pred_check
      _
    $region3: #{tpu_custom_call.1} parent=1 // pred_check_branch
      %12 = sbr.rel (0) target = $region5
    $region4: #{tpu_custom_call.1} parent=1 // pred_region
      %14 = vsyncadd [#allocation3], 0
      %s16 = sshll.u32 %s0, 4
      %s17 = int_to_ptr.hbm [resolvable:$true] %s16
      %s18 = sshll.u32 [#allocation2], 4
      %s19 = int_to_ptr.vmem [resolvable:$true] %s18
      %21 = dma.hbm_to_vmem [thread:$0]  %s17, 64, %s19, [#allocation3]
    $region5: #{tpu_custom_call.1} parent=1 // pred_fallthru
      _
    // Predicated region
    $region6: #{tpu_custom_call.1} parent=1 // pred_check
      _
    $region7: #{tpu_custom_call.1} parent=1 // pred_check_branch
      %23 = sbr.rel (0) target = $region9
    $region8: #{tpu_custom_call.1} parent=1 // pred_region
      %25 = vsyncadd [#allocation6], 0
      %s26 = sshll.u32 %s1, 4
      %s27 = int_to_ptr.hbm [resolvable:$true] %s26
      %s28 = sshll.u32 [#allocation5], 4
      %s29 = int_to_ptr.vmem [resolvable:$true] %s28
      %34 = dma.hbm_to_vmem [thread:$0]  %s27, 896, %s29, [#allocation6], 64, 64, 4
    $region9: #{tpu_custom_call.1} parent=1 // pred_fallthru
      _
    // Predicated region
    $region10: #{tpu_custom_call.1} parent=1 // pred_check
      _
    $region11: #{tpu_custom_call.1} parent=1 // pred_check_branch
      %36 = sbr.rel (0) target = $region13
    $region12: #{tpu_custom_call.1} parent=1 // pred_region
      %38 = vsyncadd [#allocation6], 0
      %s40 = sshll.u32 %s2, 4
      %s41 = int_to_ptr.hbm [resolvable:$true] %s40
      %s42 = sshll.u32 [#allocation7], 4
      %s43 = int_to_ptr.vmem [resolvable:$true] %s42
      %45 = dma.hbm_to_vmem [thread:$0]  %s41, 128, %s43, [#allocation6]
    $region13: #{tpu_custom_call.1} parent=1 // pred_fallthru
      _
    // Predicated region
    $region14: #{tpu_custom_call.1} parent=1 // pred_check
      _
    $region15: #{tpu_custom_call.1} parent=1 // pred_check_branch
      %47 = sbr.rel (0) target = $region17
    $region16: #{tpu_custom_call.1} parent=1 // pred_region
      %49 = dma.done [#allocation3], 64
    $region17: #{tpu_custom_call.1} parent=1 // pred_fallthru
      _
    // Predicated region
    $region18: #{tpu_custom_call.1} parent=1 // pred_check
      _
    $region19: #{tpu_custom_call.1} parent=1 // pred_check_branch
      %51 = sbr.rel (0) target = $region21
    $region20: #{tpu_custom_call.1} parent=1 // pred_region
      %53 = dma.done [#allocation6], 896
    $region21: #{tpu_custom_call.1} parent=1 // pred_fallthru
      _
    // Predicated region
    $region22: #{tpu_custom_call.1} parent=1 // pred_check
      _
    $region23: #{tpu_custom_call.1} parent=1 // pred_check_branch
      %55 = sbr.rel (0) target = $region25
    $region24: #{tpu_custom_call.1} parent=1 // pred_region
      %57 = dma.done [#allocation6], 128
    $region25: #{tpu_custom_call.1} parent=1 // pred_fallthru
      _
    %v59 = vld [vmem:[#allocation5] sm:$0xf]
    %v60 = vld [vmem:[#allocation5 + $0x4] sm:$0xf]
    %v61 = vld [vmem:[#allocation5 + $0x8] sm:$0xf]
    %v62 = vld [vmem:[#allocation5 + $0xc] sm:$0xf]
    %v63 = vld [vmem:[#allocation5 + $0x10] sm:$0xf]
    %v64 = vld [vmem:[#allocation5 + $0x14] sm:$0xf]
    %v65 = vld [vmem:[#allocation5 + $0x18] sm:$0xf]
    %v66 = vld [vmem:[#allocation5 + $0x1c] sm:$0xf]
    %v67 = vld [vmem:[#allocation5 + $0x20] sm:$0xf]
    %v68 = vld [vmem:[#allocation5 + $0x24] sm:$0xf]
    %v69 = vld [vmem:[#allocation5 + $0x28] sm:$0xf]
    %v70 = vld [vmem:[#allocation5 + $0x2c] sm:$0xf]
    %v71 = vld [vmem:[#allocation5 + $0x30] sm:$0xf]
    %v72 = vld [vmem:[#allocation5 + $0x34] sm:$0xf]
    %v73 = vld [vmem:[#allocation7] sm:$0x1]
    %v74 = vld [vmem:[#allocation7 + $0x1] sm:$0x1]
    %v75 = vld [vmem:[#allocation7 + $0x2] sm:$0x1]
    %v76 = vld [vmem:[#allocation2] sm:$0xf]
    %v77 = vperm.slane %v73, 0
    %v80 = vunpack.c.l.b16 %v59
    %v81 = vunpack.c.l.b16 %v60
    %v82 = vpack.c.b16 %v81, %v80
    %vm84 = vcmask 130048
    %v86 = vsel %vm84, %v76, 0
    %88 = vmatpush.bf16.msra.mxu0 0
    %89 = vmatpush.bf16.msra.mxu0 0
    %90 = vmatpush.bf16.msra.mxu0 0
    %91 = vmatpush.bf16.msra.mxu0 0
    %92 = vmatpush.bf16.msra.mxu0 0
    %93 = vmatpush.bf16.msra.mxu0 0
    %94 = vmatpush.bf16.msra.mxu0 0
    %95 = vmatpush.bf16.msra.mxu0 %v82
    %96 = vmatmul.bf16.gmra.mxu0 %v86
    %v97 = vpop.f32.mrf.mxu0
    %v98 = vadd.f32 %v77, %v97
    %v99 = vpop.f32.mrf.mxu0
    %100 = vdwg.mxu0
    %v101 = vmax.f32 %v98, 0.0
    %v102 = vpack.c.bf16 %v101, %v101
    %v103 = vperm.slane %v74, 0
    %v108 = vunpack.c.l.b16 %v61
    %v109 = vunpack.c.l.b16 %v62
    %v110 = vunpack.c.l.b16 %v63
    %v111 = vunpack.c.l.b16 %v64
    %v112 = vpack.c.b16 %v109, %v108
    %v113 = vpack.c.b16 %v111, %v110
    %vm116 = vcmask 261120
    %v118 = vsel %vm116, %v102, 0
    %120 = vmatpush.bf16.msra.mxu0 0
    %121 = vmatpush.bf16.msra.mxu0 0
    %122 = vmatpush.bf16.msra.mxu0 0
    %123 = vmatpush.bf16.msra.mxu0 0
    %124 = vmatpush.bf16.msra.mxu0 0
    %125 = vmatpush.bf16.msra.mxu0 0
    %126 = vmatpush.bf16.msra.mxu0 %v113
    %127 = vmatpush.bf16.msra.mxu0 %v112
    %128 = vmatmul.bf16.gmra.mxu0 %v118
    %v129 = vpop.f32.mrf.mxu0
    %v130 = vadd.f32 %v103, %v129
    %v131 = vpop.f32.mrf.mxu0
    %132 = vdwg.mxu0
    %v133 = vmax.f32 %v130, 0.0
    %v134 = vpack.c.bf16 %v133, %v133
    %v135 = vperm.slane %v75, 0
    %v144 = vunpack.c.l.b16 %v65
    %v145 = vunpack.c.l.b16 %v66
    %v146 = vunpack.c.l.b16 %v67
    %v147 = vunpack.c.l.b16 %v68
    %v148 = vunpack.c.l.b16 %v69
    %v149 = vunpack.c.l.b16 %v70
    %v150 = vunpack.c.l.b16 %v71
    %v151 = vunpack.c.l.b16 %v72
    %v152 = vpack.c.b16 %v145, %v144
    %v153 = vpack.c.b16 %v147, %v146
    %v154 = vpack.c.b16 %v149, %v148
    %v155 = vpack.c.b16 %v151, %v150
    %vm160 = vcmask 523264
    %v162 = vsel %vm160, %v134, 0
    %164 = vmatpush.bf16.msra.mxu0 0
    %165 = vmatpush.bf16.msra.mxu0 0
    %166 = vmatpush.bf16.msra.mxu0 0
    %167 = vmatpush.bf16.msra.mxu0 0
    %168 = vmatpush.bf16.msra.mxu0 %v155
    %169 = vmatpush.bf16.msra.mxu0 %v154
    %170 = vmatpush.bf16.msra.mxu0 %v153
    %171 = vmatpush.bf16.msra.mxu0 %v152
    %172 = vmatmul.bf16.gmra.mxu0 %v162
    %v173 = vpop.f32.mrf.mxu0
    %v174 = vadd.f32 %v135, %v173
    %v175 = vpop.f32.mrf.mxu0
    %176 = vdwg.mxu0
    %vm177 = vcmask 64512
    %178 = vst.msk [vmem:[#allocation8] sm:$0xff] %vm177, %v174
    // Predicated region
    $region26: #{tpu_custom_call.1} parent=1 // pred_check
      _
    $region27: #{tpu_custom_call.1} parent=1 // pred_check_branch
      %180 = sbr.rel (0) target = $region29
    $region28: #{tpu_custom_call.1} parent=1 // pred_region
      %182 = vsyncadd [#allocation4], 0
      %s184 = sshll.u32 [#allocation8], 4
      %s185 = int_to_ptr.vmem [resolvable:$true] %s184
      %s186 = sshll.u32 %s3, 4
      %s187 = int_to_ptr.hbm [resolvable:$true] %s186
      %189 = dma.vmem_to_hbm [thread:$0]  %s185, 128, %s187, [#allocation4]
    $region29: #{tpu_custom_call.1} parent=1 // pred_fallthru
      _
    // Predicated region
    $region30: #{tpu_custom_call.1} parent=1 // pred_check
      _
    $region31: #{tpu_custom_call.1} parent=1 // pred_check_branch
      %191 = sbr.rel (0) target = $region33
    $region32: #{tpu_custom_call.1} parent=1 // pred_region
      %193 = dma.done [#allocation4], 128
    $region33: #{tpu_custom_call.1} parent=1 // pred_fallthru
      _
    %194 = vsyncpa [#allocation3], 1
    %195 = vsyncpa [#allocation6], 1
    %196 = vsyncpa [#allocation4], 1

</llo_original>
